<compile_context>
chip_gen: v7x
topology: tpu7x:2x2x1
jax: 0.10.0
libtpu: 0.0.40
codegen_flags: <defaults>
</compile_context>

<pallas_src>
import jax
import jax.numpy as jnp
from jax.experimental import pallas as pl
from jax.experimental.pallas import tpu as pltpu


def _fusion_kernel(img_ref, seq_ref, w1t_ref, w2a_ref, w2b_ref, b2_ref, out_ref):
    cdt = w1t_ref.dtype  # MXU compute dtype (bf16)

    # Independent img-path matmul: [BM, img_dim] @ [img_dim, fused]
    acc = jnp.dot(img_ref[...].astype(cdt), w2a_ref[...],
                  preferred_element_type=jnp.float32)

    # seq FC (b1 already folded into b2'): [BM, seq_dim] @ [seq_dim, hidden]
    h = jnp.dot(seq_ref[...].astype(cdt), w1t_ref[...],
                preferred_element_type=jnp.float32)

    # Second half of the fused matmul: [BM, hidden] @ [hidden, fused]
    acc = acc + jnp.dot(h.astype(cdt), w2b_ref[...],
                        preferred_element_type=jnp.float32)

    # Epilogue in f32 (v5e has no bf16 VPU); single cast at the store.
    out_ref[...] = (acc + b2_ref[...]).astype(out_ref.dtype)


def prepare_fusion_params(w1, b1, w2, b2, img_feat_dim, *, weight_dtype=jnp.bfloat16):
    """One-time (param-load time) preprocessing — NOT part of the hot path.

    w1: [hidden, seq_dim], b1: [hidden], w2: [fused, img_dim+hidden], b2: [fused]
    (PyTorch nn.Linear layouts). Returns (w1t, w2a, w2b, b2_eff) where
      w1t [seq_dim, hidden], w2a [img_dim, fused], w2b [hidden, fused]  (weight_dtype)
      b2_eff = b2 + b1 @ w2b  as [1, fused] in f32.
    """
    w1 = jnp.asarray(w1, jnp.float32)
    w2 = jnp.asarray(w2, jnp.float32)
    b1 = jnp.asarray(b1, jnp.float32)
    b2 = jnp.asarray(b2, jnp.float32)

    w1t = w1.T                        # [seq_dim, hidden]
    w2t = w2.T                        # [img_dim + hidden, fused]
    w2a = w2t[:img_feat_dim]          # [img_dim, fused]
    w2b = w2t[img_feat_dim:]          # [hidden, fused]

    # Fold b1 into the output bias (exact in f32): b2' = b2 + b1 @ w2b.
    b2_eff = (b2 + b1 @ w2b).reshape(1, -1).astype(jnp.float32)

    return (w1t.astype(weight_dtype),
            w2a.astype(weight_dtype),
            w2b.astype(weight_dtype),
            b2_eff)


def _nbytes(shape, dtype):
    n = 1
    for s in shape:
        n *= int(s)
    return n * jnp.dtype(dtype).itemsize


def image_sequence_fusion(img_feat, seq_feat, params, *, block_b=512):
    """img_feat: [B, img_dim], seq_feat: [B, seq_dim]; params from
    prepare_fusion_params(). Returns [B, fused] in float32."""
    w1t, w2a, w2b, b2_eff = params
    B, img_dim = img_feat.shape
    _, seq_dim = seq_feat.shape
    hidden = w1t.shape[1]
    fused_size = w2a.shape[1]

    bm = min(block_b, B)              # batch tile (>=8 or == B for tiny batches)
    grid = (pl.cdiv(B, bm),)

    # Weights stay VMEM-resident: constant block index across the grid.
    weight_spec = lambda shape: pl.BlockSpec(shape, lambda i: (0, 0))

    # VMEM budget = double-buffered blocks + headroom for Mosaic scratch
    # (sized for the smallest generation, v7x: 64 MiB physical / 32 MiB scoped).
    act_bytes = (_nbytes((bm, img_dim), img_feat.dtype)
                 + _nbytes((bm, seq_dim), seq_feat.dtype)
                 + _nbytes((bm, fused_size), jnp.float32))
    w_bytes = (_nbytes((seq_dim, hidden), w1t.dtype)
               + _nbytes((img_dim, fused_size), w2a.dtype)
               + _nbytes((hidden, fused_size), w2b.dtype)
               + _nbytes((1, fused_size), b2_eff.dtype))
    vmem_bytes = 2 * (act_bytes + w_bytes) + (4 << 20)
    vmem_bytes = int(min(max(vmem_bytes, 8 << 20), 32 << 20))

    return pl.pallas_call(
        _fusion_kernel,
        out_shape=jax.ShapeDtypeStruct((B, fused_size), jnp.float32),
        grid=grid,
        in_specs=[
            pl.BlockSpec((bm, img_dim), lambda i: (i, 0)),
            pl.BlockSpec((bm, seq_dim), lambda i: (i, 0)),
            weight_spec((seq_dim, hidden)),
            weight_spec((img_dim, fused_size)),
            weight_spec((hidden, fused_size)),
            weight_spec((1, fused_size)),
        ],
        out_specs=pl.BlockSpec((bm, fused_size), lambda i: (i, 0)),
        compiler_params=pltpu.CompilerParams(
            dimension_semantics=("parallel",),
            vmem_limit_bytes=vmem_bytes,
        ),
    )(img_feat, seq_feat, w1t, w2a, w2b, b2_eff)


def _reference(img_feat, seq_feat, w1, b1, w2, b2):
    h = seq_feat @ w1.T + b1
    feat_cat = jnp.concatenate([img_feat, h], axis=-1)
    return feat_cat @ w2.T + b2


if __name__ == "__main__":
    # Module defaults: img_feat_dim=128, seq_feat_dim=256, hidden=128, fused=128.
    batch = 8
    img_feat_dim, seq_feat_dim, hidden_size, fused_size = 128, 256, 128, 128

    key = jax.random.PRNGKey(0)
    k_img, k_seq, k_w1, k_b1, k_w2, k_b2 = jax.random.split(key, 6)

    img_feat = jax.random.normal(k_img, (batch, img_feat_dim), jnp.float32)
    seq_feat = jax.random.normal(k_seq, (batch, seq_feat_dim), jnp.float32)

    # Deterministic parameter init (PyTorch nn.Linear-style uniform bounds).
    bound1 = 1.0 / (seq_feat_dim ** 0.5)
    w1 = jax.random.uniform(k_w1, (hidden_size, seq_feat_dim), jnp.float32, -bound1, bound1)
    b1 = jax.random.uniform(k_b1, (hidden_size,), jnp.float32, -bound1, bound1)

    in2 = img_feat_dim + hidden_size
    bound2 = 1.0 / (in2 ** 0.5)
    w2 = jax.random.uniform(k_w2, (fused_size, in2), jnp.float32, -bound2, bound2)
    b2 = jax.random.uniform(k_b2, (fused_size,), jnp.float32, -bound2, bound2)

    # One-time parameter prep (out of the hot path).
    params = prepare_fusion_params(w1, b1, w2, b2, img_feat_dim)
    params = jax.block_until_ready(params)

    out = image_sequence_fusion(img_feat, seq_feat, params)
    out = jax.block_until_ready(out)

    ref = _reference(img_feat, seq_feat, w1, b1, w2, b2)
    assert out.shape == (batch, fused_size)
    # bf16 MXU operands with f32 accumulation: loosen tolerance vs the f32 reference.
    assert jnp.allclose(out, ref, atol=3e-2, rtol=3e-2), "mismatch vs reference"

    print("KERNEL_OK")
</pallas_src>

<mosaic_0001>
module attributes {stable_mosaic.version = 11 : i64} {
  func.func @_fusion_kernel(%arg0: i32, %arg1: memref<8x128xf32, #tpu.memory_space<vmem>>, %arg2: memref<8x256xf32, #tpu.memory_space<vmem>>, %arg3: memref<256x128xbf16, #tpu.memory_space<vmem>>, %arg4: memref<128x128xbf16, #tpu.memory_space<vmem>>, %arg5: memref<128x128xbf16, #tpu.memory_space<vmem>>, %arg6: memref<1x128xf32, #tpu.memory_space<vmem>>, %arg7: memref<8x128xf32, #tpu.memory_space<vmem>>) attributes {dimension_semantics = [#tpu.dimension_semantics<parallel>], iteration_bounds = array<i64: 1>, scalar_prefetch = 0 : i64, scratch_operands = 0 : i64, tpu.core_type = #tpu.core_type<tc>, window_params = [{transform_indices = @transform_0, window_bounds = array<i64: 8, 128>}, {transform_indices = @transform_1, window_bounds = array<i64: 8, 256>}, {pipeline_mode = #tpu.pipeline_mode<synchronous>, transform_indices = @transform_2, window_bounds = array<i64: 256, 128>}, {pipeline_mode = #tpu.pipeline_mode<synchronous>, transform_indices = @transform_3, window_bounds = array<i64: 128, 128>}, {pipeline_mode = #tpu.pipeline_mode<synchronous>, transform_indices = @transform_4, window_bounds = array<i64: 128, 128>}, {pipeline_mode = #tpu.pipeline_mode<synchronous>, transform_indices = @transform_5, window_bounds = array<i64: 1, 128>}, {transform_indices = @transform_6, window_bounds = array<i64: 8, 128>}]} {
    %c0 = arith.constant 0 : index
    %c0_0 = arith.constant 0 : index
    %0 = vector.load %arg1[%c0, %c0_0] : memref<8x128xf32, #tpu.memory_space<vmem>>, vector<8x128xf32>
    %1 = arith.truncf %0 : vector<8x128xf32> to vector<8x128xbf16>
    %c0_1 = arith.constant 0 : index
    %c0_2 = arith.constant 0 : index
    %2 = vector.load %arg4[%c0_1, %c0_2] : memref<128x128xbf16, #tpu.memory_space<vmem>>, vector<128x128xbf16>
    %cst = arith.constant dense<0.000000e+00> : vector<8x128xf32>
    %3 = tpu.matmul %1, %2, %cst {dimension_numbers = #tpu.dot_dimension_numbers<[1], [0], [0], [1], [0, 0, 1, 1], [], []>} : vector<8x128xbf16>, vector<128x128xbf16>, vector<8x128xf32> -> vector<8x128xf32>
    %c0_3 = arith.constant 0 : index
    %c0_4 = arith.constant 0 : index
    %4 = vector.load %arg2[%c0_3, %c0_4] : memref<8x256xf32, #tpu.memory_space<vmem>>, vector<8x256xf32>
    %5 = arith.truncf %4 : vector<8x256xf32> to vector<8x256xbf16>
    %c0_5 = arith.constant 0 : index
    %c0_6 = arith.constant 0 : index
    %6 = vector.load %arg3[%c0_5, %c0_6] : memref<256x128xbf16, #tpu.memory_space<vmem>>, vector<256x128xbf16>
    %cst_7 = arith.constant dense<0.000000e+00> : vector<8x128xf32>
    %7 = tpu.matmul %5, %6, %cst_7 {dimension_numbers = #tpu.dot_dimension_numbers<[1], [0], [0], [1], [0, 0, 1, 1], [], []>} : vector<8x256xbf16>, vector<256x128xbf16>, vector<8x128xf32> -> vector<8x128xf32>
    %8 = arith.truncf %7 : vector<8x128xf32> to vector<8x128xbf16>
    %c0_8 = arith.constant 0 : index
    %c0_9 = arith.constant 0 : index
    %9 = vector.load %arg5[%c0_8, %c0_9] : memref<128x128xbf16, #tpu.memory_space<vmem>>, vector<128x128xbf16>
    %cst_10 = arith.constant dense<0.000000e+00> : vector<8x128xf32>
    %10 = tpu.matmul %8, %9, %cst_10 {dimension_numbers = #tpu.dot_dimension_numbers<[1], [0], [0], [1], [0, 0, 1, 1], [], []>} : vector<8x128xbf16>, vector<128x128xbf16>, vector<8x128xf32> -> vector<8x128xf32>
    %11 = arith.addf %3, %10 : vector<8x128xf32>
    %c0_11 = arith.constant 0 : index
    %c0_12 = arith.constant 0 : index
    %12 = vector.load %arg6[%c0_11, %c0_12] : memref<1x128xf32, #tpu.memory_space<vmem>>, vector<1x128xf32>
    %13 = vector.broadcast %12 : vector<1x128xf32> to vector<8x128xf32>
    %14 = arith.addf %11, %13 : vector<8x128xf32>
    %c0_13 = arith.constant 0 : index
    %c0_14 = arith.constant 0 : index
    %15 = vector.load %arg7[%c0_13, %c0_14] : memref<8x128xf32, #tpu.memory_space<vmem>>, vector<8x128xf32>
    tpu.vector_store %arg7[%c0_13, %c0_14], %14 {strides = array<i32>} : memref<8x128xf32, #tpu.memory_space<vmem>>, vector<8x128xf32>,
    return
  }
  func.func @transform_0(%arg0: i32) -> (i32, i32) {
    %c0_i32 = arith.constant 0 : i32
    %c0_i32_0 = arith.constant 0 : i32
    return %arg0, %c0_i32 : i32, i32
  }
  func.func @transform_1(%arg0: i32) -> (i32, i32) {
    %c0_i32 = arith.constant 0 : i32
    %c0_i32_0 = arith.constant 0 : i32
    return %arg0, %c0_i32 : i32, i32
  }
  func.func @transform_2(%arg0: i32) -> (i32, i32) {
    %c0_i32 = arith.constant 0 : i32
    %c0_i32_0 = arith.constant 0 : i32
    %c0_i32_1 = arith.constant 0 : i32
    return %c0_i32, %c0_i32_0 : i32, i32
  }
  func.func @transform_3(%arg0: i32) -> (i32, i32) {
    %c0_i32 = arith.constant 0 : i32
    %c0_i32_0 = arith.constant 0 : i32
    %c0_i32_1 = arith.constant 0 : i32
    return %c0_i32, %c0_i32_0 : i32, i32
  }
  func.func @transform_4(%arg0: i32) -> (i32, i32) {
    %c0_i32 = arith.constant 0 : i32
    %c0_i32_0 = arith.constant 0 : i32
    %c0_i32_1 = arith.constant 0 : i32
    return %c0_i32, %c0_i32_0 : i32, i32
  }
  func.func @transform_5(%arg0: i32) -> (i32, i32) {
    %c0_i32 = arith.constant 0 : i32
    %c0_i32_0 = arith.constant 0 : i32
    %c0_i32_1 = arith.constant 0 : i32
    return %c0_i32, %c0_i32_0 : i32, i32
  }
  func.func @transform_6(%arg0: i32) -> (i32, i32) {
    %c0_i32 = arith.constant 0 : i32
    %c0_i32_0 = arith.constant 0 : i32
    return %arg0, %c0_i32 : i32, i32
  }
}

</mosaic_0001>

<llo_original>
// kernel: tpu_custom_call.1
$region0: #{tpu_custom_call.1}
  #allocation0 [shape = 'u32[]', space=smem, size = 0x4, offset = 0x4, fixed_abs, tag = 'smem constant byte address 0x4 - core index']
  #allocation1 [shape = 'u32[144,128]{1,0:T(1,128)}', space=vmem, size = 0x12000, scoped, tag = 'internal scratch']
  %s0 = inlined_call_operand.hbm [shape: f32[8,128], index: 0, kind: input, shape index: {}]
  %s1 = inlined_call_operand.hbm [shape: f32[8,256], index: 1, kind: input, shape index: {}]
  %s2 = inlined_call_operand.hbm [shape: bf16[256,128], index: 2, kind: input, shape index: {}]
  %s3 = inlined_call_operand.hbm [shape: bf16[128,128], index: 3, kind: input, shape index: {}]
  %s4 = inlined_call_operand.hbm [shape: bf16[128,128], index: 4, kind: input, shape index: {}]
  %s5 = inlined_call_operand.vmem [shape: f32[1,128], index: 5, kind: input, shape index: {}]
  %s6 = inlined_call_operand.hbm [shape: f32[8,128], index: 6, kind: output, shape index: {}]
  %s7 = sld [smem:[#allocation0]]
  $region54: #{tpu_custom_call.1} parent=0
    _
  %s9 = ssub.s32 1, %s7
  %s10 = scalar_select 0, %s9, %s7
  $region1: #{tpu_custom_call.1} parent=0
    #allocation2 [shape = 'u8[4096]{0}', space=vmem, size = 0x1000, scoped, tag = 'input window, operand 0, single buffered']
    #allocation3 [shape = 's32[1]{0}', space=sflag, size = 0x4, scoped, tag = 'scoped memory for tpu_custom_call.1']
    #allocation4 [shape = 's32[1]{0}', space=sflag, size = 0x4, scoped, tag = 'scoped memory for tpu_custom_call.1']
    #allocation5 [shape = 'u8[8192]{0}', space=vmem, size = 0x2000, scoped, tag = 'input window, operand 1, single buffered']
    #allocation6 [shape = 's32[1]{0}', space=sflag, size = 0x4, scoped, tag = 'scoped memory for tpu_custom_call.1']
    #allocation7 [shape = 'u8[65536]{0}', space=vmem, size = 0x10000, scoped, tag = 'input window, operand 2, single buffered']
    #allocation8 [shape = 'u8[32768]{0}', space=vmem, size = 0x8000, scoped, tag = 'input window, operand 3, single buffered']
    #allocation9 [shape = 's32[1]{0}', space=sflag, size = 0x4, scoped, tag = 'scoped memory for tpu_custom_call.1']
    #allocation10 [shape = 'u8[32768]{0}', space=vmem, size = 0x8000, scoped, tag = 'input window, operand 4, single buffered']
    #allocation11 [shape = 'u8[4096]{0}', space=vmem, size = 0x1000, scoped, tag = 'output window, operand 0, single buffered']
    %11 = vsyncpa [#allocation3], 0
    %12 = vsyncpa [#allocation6], 0
    %13 = vsyncpa [#allocation9], 0
    %14 = vsyncpa [#allocation4], 0
    // Predicated region
    $region2: #{tpu_custom_call.1} parent=1 // pred_check
      _
    $region3: #{tpu_custom_call.1} parent=1 // pred_check_branch
      %16 = sbr.rel (0) target = $region5
    $region4: #{tpu_custom_call.1} parent=1 // pred_region
      %s18 = ssub.s32 128, 128
      %19 = vsyncadd [#allocation3], %s18
      %s21 = sshll.u32 [#allocation2], 4
      %s22 = int_to_ptr.vmem [resolvable:$true] %s21
      %24 = dma.hbm_to_vmem [thread:$0]  %s0, 128, %s22, [#allocation3]
    $region5: #{tpu_custom_call.1} parent=1 // pred_fallthru
      _
    // Predicated region
    $region6: #{tpu_custom_call.1} parent=1 // pred_check
      _
    $region7: #{tpu_custom_call.1} parent=1 // pred_check_branch
      %26 = sbr.rel (0) target = $region9
    $region8: #{tpu_custom_call.1} parent=1 // pred_region
      %s28 = ssub.s32 256, 256
      %29 = vsyncadd [#allocation6], %s28
      %s31 = sshll.u32 [#allocation5], 4
      %s32 = int_to_ptr.vmem [resolvable:$true] %s31
      %34 = dma.hbm_to_vmem [thread:$0]  %s1, 256, %s32, [#allocation6]
    $region9: #{tpu_custom_call.1} parent=1 // pred_fallthru
      _
    // Predicated region
    $region10: #{tpu_custom_call.1} parent=1 // pred_check
      _
    $region11: #{tpu_custom_call.1} parent=1 // pred_check_branch
      %36 = sbr.rel (0) target = $region13
    $region12: #{tpu_custom_call.1} parent=1 // pred_region
      %s38 = ssub.s32 2048, 2048
      %39 = vsyncadd [#allocation6], %s38
      %s40 = sshll.u32 [#allocation7], 4
      %s41 = int_to_ptr.vmem [resolvable:$true] %s40
      %46 = dma.hbm_to_vmem [thread:$0]  %s2, 2048, %s41, [#allocation6], 64, 64, 4
    $region13: #{tpu_custom_call.1} parent=1 // pred_fallthru
      _
    // Predicated region
    $region14: #{tpu_custom_call.1} parent=1 // pred_check
      _
    $region15: #{tpu_custom_call.1} parent=1 // pred_check_branch
      %48 = sbr.rel (0) target = $region17
    $region16: #{tpu_custom_call.1} parent=1 // pred_region
      %s50 = ssub.s32 1024, 1024
      %51 = vsyncadd [#allocation9], %s50
      %s52 = sshll.u32 [#allocation8], 4
      %s53 = int_to_ptr.vmem [resolvable:$true] %s52
      %58 = dma.hbm_to_vmem [thread:$0]  %s3, 1024, %s53, [#allocation9], 64, 64, 4
    $region17: #{tpu_custom_call.1} parent=1 // pred_fallthru
      _
    // Predicated region
    $region18: #{tpu_custom_call.1} parent=1 // pred_check
      _
    $region19: #{tpu_custom_call.1} parent=1 // pred_check_branch
      %60 = sbr.rel (0) target = $region21
    $region20: #{tpu_custom_call.1} parent=1 // pred_region
      %s62 = ssub.s32 1024, 1024
      %63 = vsyncadd [#allocation9], %s62
      %s64 = sshll.u32 [#allocation10], 4
      %s65 = int_to_ptr.vmem [resolvable:$true] %s64
      %70 = dma.hbm_to_vmem [thread:$0]  %s4, 1024, %s65, [#allocation9], 64, 64, 4
    $region21: #{tpu_custom_call.1} parent=1 // pred_fallthru
      _
    // Predicated region
    $region22: #{tpu_custom_call.1} parent=1 // pred_check
      _
    $region23: #{tpu_custom_call.1} parent=1 // pred_check_branch
      %72 = sbr.rel (0) target = $region25
    $region24: #{tpu_custom_call.1} parent=1 // pred_region
      _
    $region25: #{tpu_custom_call.1} parent=1 // pred_fallthru
      _
    // Predicated region
    $region26: #{tpu_custom_call.1} parent=1 // pred_check
      _
    $region27: #{tpu_custom_call.1} parent=1 // pred_check_branch
      %74 = sbr.rel (0) target = $region29
    $region28: #{tpu_custom_call.1} parent=1 // pred_region
      %75 = dma.done [#allocation3], 128
    $region29: #{tpu_custom_call.1} parent=1 // pred_fallthru
      _
    // Predicated region
    $region30: #{tpu_custom_call.1} parent=1 // pred_check
      _
    $region31: #{tpu_custom_call.1} parent=1 // pred_check_branch
      %77 = sbr.rel (0) target = $region33
    $region32: #{tpu_custom_call.1} parent=1 // pred_region
      %78 = dma.done [#allocation6], 256
    $region33: #{tpu_custom_call.1} parent=1 // pred_fallthru
      _
    // Predicated region
    $region34: #{tpu_custom_call.1} parent=1 // pred_check
      _
    $region35: #{tpu_custom_call.1} parent=1 // pred_check_branch
      %80 = sbr.rel (0) target = $region37
    $region36: #{tpu_custom_call.1} parent=1 // pred_region
      %81 = dma.done [#allocation6], 2048
    $region37: #{tpu_custom_call.1} parent=1 // pred_fallthru
      _
    // Predicated region
    $region38: #{tpu_custom_call.1} parent=1 // pred_check
      _
    $region39: #{tpu_custom_call.1} parent=1 // pred_check_branch
      %83 = sbr.rel (0) target = $region41
    $region40: #{tpu_custom_call.1} parent=1 // pred_region
      %84 = dma.done [#allocation9], 1024
    $region41: #{tpu_custom_call.1} parent=1 // pred_fallthru
      _
    // Predicated region
    $region42: #{tpu_custom_call.1} parent=1 // pred_check
      _
    $region43: #{tpu_custom_call.1} parent=1 // pred_check_branch
      %86 = sbr.rel (0) target = $region45
    $region44: #{tpu_custom_call.1} parent=1 // pred_region
      %87 = dma.done [#allocation9], 1024
    $region45: #{tpu_custom_call.1} parent=1 // pred_fallthru
      _
    %v89 = vld [vmem:[#allocation2] sm:$0xff]
    %v90 = vpack.c.bf16 %v89, %v89
    %v91 = vld [vmem:[#allocation8] sm:$0xf]
    %v92 = vld [vmem:[#allocation8 + $0x4] sm:$0xf]
    %v93 = vld [vmem:[#allocation8 + $0x8] sm:$0xf]
    %v94 = vld [vmem:[#allocation8 + $0xc] sm:$0xf]
    %v95 = vld [vmem:[#allocation8 + $0x10] sm:$0xf]
    %v96 = vld [vmem:[#allocation8 + $0x14] sm:$0xf]
    %v97 = vld [vmem:[#allocation8 + $0x18] sm:$0xf]
    %v98 = vld [vmem:[#allocation8 + $0x1c] sm:$0xf]
    %v99 = vld [vmem:[#allocation8 + $0x20] sm:$0xf]
    %v100 = vld [vmem:[#allocation8 + $0x24] sm:$0xf]
    %v101 = vld [vmem:[#allocation8 + $0x28] sm:$0xf]
    %v102 = vld [vmem:[#allocation8 + $0x2c] sm:$0xf]
    %v103 = vld [vmem:[#allocation8 + $0x30] sm:$0xf]
    %v104 = vld [vmem:[#allocation8 + $0x34] sm:$0xf]
    %v105 = vld [vmem:[#allocation8 + $0x38] sm:$0xf]
    %v106 = vld [vmem:[#allocation8 + $0x3c] sm:$0xf]
    %v107 = vld [vmem:[#allocation5] sm:$0xff]
    %v108 = vld [vmem:[#allocation5 + $0x8] sm:$0xff]
    %v109 = vpack.c.bf16 %v107, %v107
    %v110 = vpack.c.bf16 %v108, %v108
    %v111 = vld [vmem:[#allocation7] sm:$0xf]
    %v112 = vld [vmem:[#allocation7 + $0x4] sm:$0xf]
    %v113 = vld [vmem:[#allocation7 + $0x8] sm:$0xf]
    %v114 = vld [vmem:[#allocation7 + $0xc] sm:$0xf]
    %v115 = vld [vmem:[#allocation7 + $0x10] sm:$0xf]
    %v116 = vld [vmem:[#allocation7 + $0x14] sm:$0xf]
    %v117 = vld [vmem:[#allocation7 + $0x18] sm:$0xf]
    %v118 = vld [vmem:[#allocation7 + $0x1c] sm:$0xf]
    %v119 = vld [vmem:[#allocation7 + $0x20] sm:$0xf]
    %v120 = vld [vmem:[#allocation7 + $0x24] sm:$0xf]
    %v121 = vld [vmem:[#allocation7 + $0x28] sm:$0xf]
    %v122 = vld [vmem:[#allocation7 + $0x2c] sm:$0xf]
    %v123 = vld [vmem:[#allocation7 + $0x30] sm:$0xf]
    %v124 = vld [vmem:[#allocation7 + $0x34] sm:$0xf]
    %v125 = vld [vmem:[#allocation7 + $0x38] sm:$0xf]
    %v126 = vld [vmem:[#allocation7 + $0x3c] sm:$0xf]
    %v127 = vld [vmem:[#allocation7 + $0x40] sm:$0xf]
    %v128 = vld [vmem:[#allocation7 + $0x44] sm:$0xf]
    %v129 = vld [vmem:[#allocation7 + $0x48] sm:$0xf]
    %v130 = vld [vmem:[#allocation7 + $0x4c] sm:$0xf]
    %v131 = vld [vmem:[#allocation7 + $0x50] sm:$0xf]
    %v132 = vld [vmem:[#allocation7 + $0x54] sm:$0xf]
    %v133 = vld [vmem:[#allocation7 + $0x58] sm:$0xf]
    %v134 = vld [vmem:[#allocation7 + $0x5c] sm:$0xf]
    %v135 = vld [vmem:[#allocation7 + $0x60] sm:$0xf]
    %v136 = vld [vmem:[#allocation7 + $0x64] sm:$0xf]
    %v137 = vld [vmem:[#allocation7 + $0x68] sm:$0xf]
    %v138 = vld [vmem:[#allocation7 + $0x6c] sm:$0xf]
    %v139 = vld [vmem:[#allocation7 + $0x70] sm:$0xf]
    %v140 = vld [vmem:[#allocation7 + $0x74] sm:$0xf]
    %v141 = vld [vmem:[#allocation7 + $0x78] sm:$0xf]
    %v142 = vld [vmem:[#allocation7 + $0x7c] sm:$0xf]
    %v175 = vunpack.c.l.b16 %v111
    %v176 = vunpack.c.l.b16 %v112
    %v177 = vunpack.c.l.b16 %v113
    %v178 = vunpack.c.l.b16 %v114
    %v179 = vunpack.c.l.b16 %v115
    %v180 = vunpack.c.l.b16 %v116
    %v181 = vunpack.c.l.b16 %v117
    %v182 = vunpack.c.l.b16 %v118
    %v183 = vunpack.c.l.b16 %v119
    %v184 = vunpack.c.l.b16 %v120
    %v185 = vunpack.c.l.b16 %v121
    %v186 = vunpack.c.l.b16 %v122
    %v187 = vunpack.c.l.b16 %v123
    %v188 = vunpack.c.l.b16 %v124
    %v189 = vunpack.c.l.b16 %v125
    %v190 = vunpack.c.l.b16 %v126
    %v191 = vunpack.c.l.b16 %v127
    %v192 = vunpack.c.l.b16 %v128
    %v193 = vunpack.c.l.b16 %v129
    %v194 = vunpack.c.l.b16 %v130
    %v195 = vunpack.c.l.b16 %v131
    %v196 = vunpack.c.l.b16 %v132
    %v197 = vunpack.c.l.b16 %v133
    %v198 = vunpack.c.l.b16 %v134
    %v199 = vunpack.c.l.b16 %v135
    %v200 = vunpack.c.l.b16 %v136
    %v201 = vunpack.c.l.b16 %v137
    %v202 = vunpack.c.l.b16 %v138
    %v203 = vunpack.c.l.b16 %v139
    %v204 = vunpack.c.l.b16 %v140
    %v205 = vunpack.c.l.b16 %v141
    %v206 = vunpack.c.l.b16 %v142
    %v207 = vpack.c.b16 %v176, %v175
    %v208 = vpack.c.b16 %v178, %v177
    %v209 = vpack.c.b16 %v180, %v179
    %v210 = vpack.c.b16 %v182, %v181
    %v211 = vpack.c.b16 %v184, %v183
    %v212 = vpack.c.b16 %v186, %v185
    %v213 = vpack.c.b16 %v188, %v187
    %v214 = vpack.c.b16 %v190, %v189
    %v215 = vpack.c.b16 %v192, %v191
    %v216 = vpack.c.b16 %v194, %v193
    %v217 = vpack.c.b16 %v196, %v195
    %v218 = vpack.c.b16 %v198, %v197
    %v219 = vpack.c.b16 %v200, %v199
    %v220 = vpack.c.b16 %v202, %v201
    %v221 = vpack.c.b16 %v204, %v203
    %v222 = vpack.c.b16 %v206, %v205
    %239 = vmatprep.subr.bf16.mxu0 0
    %240 = vmatpush1.bf16.msra.mxu0 %v207
    %241 = vmatprep.subr.bf16.mxu0 0
    %242 = vmatpush1.bf16.msra.mxu0 %v208
    %243 = vmatprep.subr.bf16.mxu0 0
    %244 = vmatpush1.bf16.msra.mxu0 %v209
    %245 = vmatprep.subr.bf16.mxu0 0
    %246 = vmatpush1.bf16.msra.mxu0 %v210
    %247 = vmatprep.subr.bf16.mxu0 0
    %248 = vmatpush1.bf16.msra.mxu0 %v211
    %249 = vmatprep.subr.bf16.mxu0 0
    %250 = vmatpush1.bf16.msra.mxu0 %v212
    %251 = vmatprep.subr.bf16.mxu0 0
    %252 = vmatpush1.bf16.msra.mxu0 %v213
    %253 = vmatprep.subr.bf16.mxu0 0
    %254 = vmatpush1.bf16.msra.mxu0 %v214
    %255 = vmatprep.subr.bf16.mxu0 0
    %256 = vmatpush1.bf16.msra.mxu0 %v215
    %257 = vmatprep.subr.bf16.mxu0 0
    %258 = vmatpush1.bf16.msra.mxu0 %v216
    %259 = vmatprep.subr.bf16.mxu0 0
    %260 = vmatpush1.bf16.msra.mxu0 %v217
    %261 = vmatprep.subr.bf16.mxu0 0
    %262 = vmatpush1.bf16.msra.mxu0 %v218
    %263 = vmatprep.subr.bf16.mxu0 0
    %264 = vmatpush1.bf16.msra.mxu0 %v219
    %265 = vmatprep.subr.bf16.mxu0 0
    %266 = vmatpush1.bf16.msra.mxu0 %v220
    %267 = vmatprep.subr.bf16.mxu0 0
    %268 = vmatpush1.bf16.msra.mxu0 %v221
    %269 = vmatprep.subr.bf16.mxu0 0
    %270 = vmatpush1.bf16.msra.mxu0 %v222
    %271 = vmatprep.mubr.bf16.mxu0 %v110
    %272 = vmatmul.mubr.bf16.gmra.mrb[0].mxu0 %v109
    %v273 = vpop.f32.mrb[0].mxu0
    %v274 = vadd.f32 0.0, %v273
    %v275 = vpop.f32.mrb[0].mxu0
    %v276 = vpop.f32.mrb[0].mxu0
    %v277 = vpop.f32.mrb[0].mxu0
    %278 = vdwg.mxu0
    %v279 = vpack.c.bf16 %v274, %v274
    %v280 = vld [vmem:[#allocation10] sm:$0xf]
    %v281 = vld [vmem:[#allocation10 + $0x4] sm:$0xf]
    %v282 = vld [vmem:[#allocation10 + $0x8] sm:$0xf]
    %v283 = vld [vmem:[#allocation10 + $0xc] sm:$0xf]
    %v284 = vld [vmem:[#allocation10 + $0x10] sm:$0xf]
    %v285 = vld [vmem:[#allocation10 + $0x14] sm:$0xf]
    %v286 = vld [vmem:[#allocation10 + $0x18] sm:$0xf]
    %v287 = vld [vmem:[#allocation10 + $0x1c] sm:$0xf]
    %v288 = vld [vmem:[#allocation10 + $0x20] sm:$0xf]
    %v289 = vld [vmem:[#allocation10 + $0x24] sm:$0xf]
    %v290 = vld [vmem:[#allocation10 + $0x28] sm:$0xf]
    %v291 = vld [vmem:[#allocation10 + $0x2c] sm:$0xf]
    %v292 = vld [vmem:[#allocation10 + $0x30] sm:$0xf]
    %v293 = vld [vmem:[#allocation10 + $0x34] sm:$0xf]
    %v294 = vld [vmem:[#allocation10 + $0x38] sm:$0xf]
    %v295 = vld [vmem:[#allocation10 + $0x3c] sm:$0xf]
    %v312 = vunpack.c.l.b16 %v280
    %v313 = vunpack.c.l.b16 %v281
    %v314 = vunpack.c.l.b16 %v282
    %v315 = vunpack.c.l.b16 %v283
    %v316 = vunpack.c.l.b16 %v284
    %v317 = vunpack.c.l.b16 %v285
    %v318 = vunpack.c.l.b16 %v286
    %v319 = vunpack.c.l.b16 %v287
    %v320 = vunpack.c.l.b16 %v288
    %v321 = vunpack.c.l.b16 %v289
    %v322 = vunpack.c.l.b16 %v290
    %v323 = vunpack.c.l.b16 %v291
    %v324 = vunpack.c.l.b16 %v292
    %v325 = vunpack.c.l.b16 %v293
    %v326 = vunpack.c.l.b16 %v294
    %v327 = vunpack.c.l.b16 %v295
    %v328 = vpack.c.b16 %v313, %v312
    %v329 = vpack.c.b16 %v315, %v314
    %v330 = vpack.c.b16 %v317, %v316
    %v331 = vpack.c.b16 %v319, %v318
    %v332 = vpack.c.b16 %v321, %v320
    %v333 = vpack.c.b16 %v323, %v322
    %v334 = vpack.c.b16 %v325, %v324
    %v335 = vpack.c.b16 %v327, %v326
    %344 = vmatprep.subr.bf16.mxu0 0
    %345 = vmatpush1.bf16.msra.mxu0 %v328
    %346 = vmatprep.subr.bf16.mxu0 0
    %347 = vmatpush1.bf16.msra.mxu0 %v329
    %348 = vmatprep.subr.bf16.mxu0 0
    %349 = vmatpush1.bf16.msra.mxu0 %v330
    %350 = vmatprep.subr.bf16.mxu0 0
    %351 = vmatpush1.bf16.msra.mxu0 %v331
    %352 = vmatprep.subr.bf16.mxu0 0
    %353 = vmatpush1.bf16.msra.mxu0 %v332
    %354 = vmatprep.subr.bf16.mxu0 0
    %355 = vmatpush1.bf16.msra.mxu0 %v333
    %356 = vmatprep.subr.bf16.mxu0 0
    %357 = vmatpush1.bf16.msra.mxu0 %v334
    %358 = vmatprep.subr.bf16.mxu0 0
    %359 = vmatpush1.bf16.msra.mxu0 %v335
    %360 = vmatprep.subr.bf16.mxu0 0
    %361 = vmatpush1.bf16.msra.mxu0 0
    %362 = vmatprep.subr.bf16.mxu0 0
    %363 = vmatpush1.bf16.msra.mxu0 0
    %364 = vmatprep.subr.bf16.mxu0 0
    %365 = vmatpush1.bf16.msra.mxu0 0
    %366 = vmatprep.subr.bf16.mxu0 0
    %367 = vmatpush1.bf16.msra.mxu0 0
    %368 = vmatprep.subr.bf16.mxu0 0
    %369 = vmatpush1.bf16.msra.mxu0 0
    %370 = vmatprep.subr.bf16.mxu0 0
    %371 = vmatpush1.bf16.msra.mxu0 0
    %372 = vmatprep.subr.bf16.mxu0 0
    %373 = vmatpush1.bf16.msra.mxu0 0
    %374 = vmatprep.subr.bf16.mxu0 0
    %375 = vmatpush1.bf16.msra.mxu0 0
    %376 = vmatprep.mubr.bf16.mxu0 0
    %377 = vmatmul.mubr.bf16.gmra.mrb[0].mxu0 %v279
    %v378 = vpop.f32.mrb[0].mxu0
    %v379 = vadd.f32 0.0, %v378
    %v380 = vpop.f32.mrb[0].mxu0
    %v381 = vpop.f32.mrb[0].mxu0
    %v382 = vpop.f32.mrb[0].mxu0
    %383 = vdwg.mxu0
    %v400 = vunpack.c.l.b16 %v91
    %v401 = vunpack.c.l.b16 %v92
    %v402 = vunpack.c.l.b16 %v93
    %v403 = vunpack.c.l.b16 %v94
    %v404 = vunpack.c.l.b16 %v95
    %v405 = vunpack.c.l.b16 %v96
    %v406 = vunpack.c.l.b16 %v97
    %v407 = vunpack.c.l.b16 %v98
    %v408 = vunpack.c.l.b16 %v99
    %v409 = vunpack.c.l.b16 %v100
    %v410 = vunpack.c.l.b16 %v101
    %v411 = vunpack.c.l.b16 %v102
    %v412 = vunpack.c.l.b16 %v103
    %v413 = vunpack.c.l.b16 %v104
    %v414 = vunpack.c.l.b16 %v105
    %v415 = vunpack.c.l.b16 %v106
    %v416 = vpack.c.b16 %v401, %v400
    %v417 = vpack.c.b16 %v403, %v402
    %v418 = vpack.c.b16 %v405, %v404
    %v419 = vpack.c.b16 %v407, %v406
    %v420 = vpack.c.b16 %v409, %v408
    %v421 = vpack.c.b16 %v411, %v410
    %v422 = vpack.c.b16 %v413, %v412
    %v423 = vpack.c.b16 %v415, %v414
    %432 = vmatprep.subr.bf16.mxu0 0
    %433 = vmatpush1.bf16.msra.mxu0 %v416
    %434 = vmatprep.subr.bf16.mxu0 0
    %435 = vmatpush1.bf16.msra.mxu0 %v417
    %436 = vmatprep.subr.bf16.mxu0 0
    %437 = vmatpush1.bf16.msra.mxu0 %v418
    %438 = vmatprep.subr.bf16.mxu0 0
    %439 = vmatpush1.bf16.msra.mxu0 %v419
    %440 = vmatprep.subr.bf16.mxu0 0
    %441 = vmatpush1.bf16.msra.mxu0 %v420
    %442 = vmatprep.subr.bf16.mxu0 0
    %443 = vmatpush1.bf16.msra.mxu0 %v421
    %444 = vmatprep.subr.bf16.mxu0 0
    %445 = vmatpush1.bf16.msra.mxu0 %v422
    %446 = vmatprep.subr.bf16.mxu0 0
    %447 = vmatpush1.bf16.msra.mxu0 %v423
    %448 = vmatprep.subr.bf16.mxu0 0
    %449 = vmatpush1.bf16.msra.mxu0 0
    %450 = vmatprep.subr.bf16.mxu0 0
    %451 = vmatpush1.bf16.msra.mxu0 0
    %452 = vmatprep.subr.bf16.mxu0 0
    %453 = vmatpush1.bf16.msra.mxu0 0
    %454 = vmatprep.subr.bf16.mxu0 0
    %455 = vmatpush1.bf16.msra.mxu0 0
    %456 = vmatprep.subr.bf16.mxu0 0
    %457 = vmatpush1.bf16.msra.mxu0 0
    %458 = vmatprep.subr.bf16.mxu0 0
    %459 = vmatpush1.bf16.msra.mxu0 0
    %460 = vmatprep.subr.bf16.mxu0 0
    %461 = vmatpush1.bf16.msra.mxu0 0
    %462 = vmatprep.subr.bf16.mxu0 0
    %463 = vmatpush1.bf16.msra.mxu0 0
    %464 = vmatprep.mubr.bf16.mxu0 0
    %465 = vmatmul.mubr.bf16.gmra.mrb[0].mxu0 %v90
    %v466 = vpop.f32.mrb[0].mxu0
    %v467 = vadd.f32 %v379, %v466
    %v468 = vpop.f32.mrb[0].mxu0
    %v469 = vpop.f32.mrb[0].mxu0
    %v470 = vpop.f32.mrb[0].mxu0
    %471 = vdwg.mxu0
    %v472 = vld [vmem:[%s5] sm:$0x1]
    %v474 = vlaneseq
    %v475 = vshrl.u32 %v474, 7
    %v476 = vsub.s32 0, %v475
    %v477 = vrot.slane %v472, %v476
    %v479 = vadd.f32 %v467, %v477
    %480 = vst [vmem:[#allocation11] sm:$0xff] %v479
    // Predicated region
    $region46: #{tpu_custom_call.1} parent=1 // pred_check
      _
    $region47: #{tpu_custom_call.1} parent=1 // pred_check_branch
      %482 = sbr.rel (0) target = $region49
    $region48: #{tpu_custom_call.1} parent=1 // pred_region
      %s484 = ssub.s32 128, 128
      %485 = vsyncadd [#allocation4], %s484
      %s487 = sshll.u32 [#allocation11], 4
      %s488 = int_to_ptr.vmem [resolvable:$true] %s487
      %490 = dma.vmem_to_hbm [thread:$0]  %s488, 128, %s6, [#allocation4]
    $region49: #{tpu_custom_call.1} parent=1 // pred_fallthru
      _
    // Predicated region
    $region50: #{tpu_custom_call.1} parent=1 // pred_check
      _
    $region51: #{tpu_custom_call.1} parent=1 // pred_check_branch
      %492 = sbr.rel (0) target = $region53
    $region52: #{tpu_custom_call.1} parent=1 // pred_region
      %493 = dma.done [#allocation4], 128
    $region53: #{tpu_custom_call.1} parent=1 // pred_fallthru
      _
    %494 = vsyncpa [#allocation3], 1
    %495 = vsyncpa [#allocation6], 1
    %496 = vsyncpa [#allocation9], 1
    %497 = vsyncpa [#allocation4], 1

</llo_original>
